<compile_context>
chip_gen: v6e
topology: v6e:2x2x1
jax: 0.10.0
libtpu: 0.0.40
codegen_flags: <defaults>
</compile_context>

<pallas_src>
import functools

import numpy as np
import jax
import jax.numpy as jnp
from jax import lax
from jax.experimental import pallas as pl
from jax.experimental.pallas import tpu as pltpu


def _round_up(x, m):
    return ((x + m - 1) // m) * m


def _cdiv(a, b):
    return -(-a // b)


def _vmem_capacity_bytes():
    """Per-core VMEM capacity; conservative fallback (v7x: 64 MiB/TC)."""
    try:
        info = pltpu.get_tpu_info()
        cap = getattr(info, "vmem_capacity_bytes", None)
        if cap:
            return int(cap)
    except Exception:
        pass
    return 64 << 20


# ---------------------------------------------------------------------------
# Kernel
# ---------------------------------------------------------------------------
def _stft_loss_kernel(xy_ref, basis_ref, out_ref, *, tm, k_pad, nb_pad):
    """One frame-tile of the STFT loss.

    xy_ref    : (2, TM, k_pad) bf16   stacked [x; y] framed signals
    basis_ref : (k_pad, 2*nb_pad) bf16  windowed [cos|sin] real-DFT basis
    out_ref   : (8, 128) f32          per-tile partial sums
                [0,0]=sum (y_mag-x_mag)^2, [0,1]=sum y_mag^2,
                [0,2]=sum |log y_mag - log x_mag|
    """
    # Fused real-DFT for x and y: a single MXU matmul per tile.
    lhs = xy_ref[...].reshape(2 * tm, k_pad)                 # tm % 16 == 0
    s = jnp.dot(lhs, basis_ref[...], preferred_element_type=jnp.float32)

    sq = s * s
    power = jnp.maximum(sq[:, :nb_pad] + sq[:, nb_pad:], 1e-6)   # (2tm, nb_pad)
    x_sq = power[:tm]
    y_sq = power[tm:]

    # Padded rows/cols have power == 1e-6 on both sides -> contribute ~0 to
    # s_diff / s_log and exactly 1e-6 each to s_ysq (corrected on host).
    cross = jnp.sqrt(x_sq * y_sq)                        # 1 EUP sqrt / elem
    s_diff = jnp.sum(x_sq + y_sq - 2.0 * cross)          # == sum (y_mag-x_mag)^2
    s_ysq = jnp.sum(y_sq)                                # == sum y_mag^2
    s_log = 0.5 * jnp.sum(jnp.abs(jnp.log(y_sq) - jnp.log(x_sq)))

    # Write the three scalars into lanes 0..2 of row 0 of this tile's block.
    orow = lax.broadcasted_iota(jnp.int32, (8, 128), 0)
    ocol = lax.broadcasted_iota(jnp.int32, (8, 128), 1)
    first = orow == 0
    blk = jnp.where(first & (ocol == 0), s_diff, 0.0)
    blk = blk + jnp.where(first & (ocol == 1), s_ysq, 0.0)
    blk = blk + jnp.where(first & (ocol == 2), s_log, 0.0)
    out_ref[...] = blk


# ---------------------------------------------------------------------------
# Host-side constants (windowed DFT bases), cached per resolution
# ---------------------------------------------------------------------------
_BASIS_CACHE = {}


def _windowed_basis(fft_size, win_length):
    key = (fft_size, win_length)
    if key in _BASIS_CACHE:
        return _BASIS_CACHE[key]
    n_bins = fft_size // 2 + 1
    lpad = (fft_size - win_length) // 2          # torch.stft window centering
    k_pad = _round_up(win_length, 128)           # K trimmed to win_length
    nb_pad = _round_up(n_bins, 128)

    # torch.hann_window default (periodic=True).
    m = np.arange(win_length, dtype=np.float64)
    win = 0.5 - 0.5 * np.cos(2.0 * np.pi * m / win_length)

    # DFT phase uses the absolute in-frame sample index (lpad + m).
    nn = (lpad + m)[:, None]
    kk = np.arange(n_bins, dtype=np.float64)[None, :]
    ang = 2.0 * np.pi * nn * kk / fft_size
    cos_w = np.cos(ang) * win[:, None]
    sin_w = np.sin(ang) * win[:, None]

    basis = np.zeros((k_pad, 2 * nb_pad), dtype=np.float32)
    basis[:win_length, :n_bins] = cos_w
    basis[:win_length, nb_pad:nb_pad + n_bins] = sin_w
    # NOTE: bf16 basis/frames feed the MXU; keep basis f32 if tighter
    # agreement with the f32 torch reference is required.
    basis = jnp.asarray(basis, dtype=jnp.bfloat16)

    _BASIS_CACHE[key] = (basis, n_bins, k_pad, nb_pad)
    return _BASIS_CACHE[key]


# ---------------------------------------------------------------------------
# Framing: reflect pad, then hop-strided slice+reshape chunks (no gather),
# restricted to the win_length window of each fft-length frame.
# TODO(synk): the Toeplitz/hop-block decomposition (frames@basis as a sum of
# hop-sized chunk matmuls with an inner 'arbitrary' grid axis) would avoid
# materializing the overlapped frames in HBM entirely.
# ---------------------------------------------------------------------------
def _frame_signals(x, y, fft_size, hop_size, win_length, k_pad):
    B = x.shape[0]
    pad = fft_size // 2
    lpad = (fft_size - win_length) // 2
    sig = jnp.stack([x, y]).astype(jnp.float32)              # (2, B, T)
    sig = jnp.pad(sig, ((0, 0), (0, 0), (pad, pad)), mode="reflect")
    t_pad = sig.shape[-1]
    n_frames = 1 + (t_pad - fft_size) // hop_size

    # Only samples [lpad, lpad+win) of each fft-length frame are windowed.
    sig = sig[:, :, lpad:]
    need = n_frames * hop_size + win_length
    if sig.shape[-1] < need:
        sig = jnp.pad(sig, ((0, 0), (0, 0), (0, need - sig.shape[-1])))

    chunks = []
    for j in range(0, win_length, hop_size):
        w = min(hop_size, win_length - j)
        c = sig[:, :, j:j + n_frames * hop_size]
        c = c.reshape(2, B, n_frames, hop_size)[..., :w]
        chunks.append(c)
    frames = chunks[0] if len(chunks) == 1 else jnp.concatenate(chunks, axis=-1)
    frames = frames.reshape(2, B * n_frames, win_length)      # (2, B*F, win)
    if k_pad > win_length:
        frames = jnp.pad(frames, ((0, 0), (0, 0), (0, k_pad - win_length)))
    return frames.astype(jnp.bfloat16), n_frames


# ---------------------------------------------------------------------------
# Single-resolution STFT loss
# ---------------------------------------------------------------------------
def stft_loss(x, y, fft_size, hop_size, win_length):
    basis, n_bins, k_pad, nb_pad = _windowed_basis(fft_size, win_length)
    frames, _ = _frame_signals(x, y, fft_size, hop_size, win_length, k_pad)
    n_valid = frames.shape[1]                                 # B * n_frames

    # --- tile-height selection, per-generation ---------------------------
    vmem_cap = _vmem_capacity_bytes()
    if vmem_cap >= (96 << 20):            # v5e / v6e: 128 MiB VMEM
        tm_cap = 512 if fft_size <= 1024 else 256
    else:                                 # v7x: 64 MiB / TensorCore
        tm_cap = 256 if fft_size < 4096 else 128
    # >= 2 roughly even tiles so the "parallel" grid load-balances 2 TCs.
    nt_target = max(2, _cdiv(n_valid, tm_cap))
    tm = max(16, _round_up(_cdiv(n_valid, nt_target), 16))    # 16: bf16 sublane
    n_pad = _round_up(n_valid, tm)
    num_tiles = n_pad // tm
    if n_pad > n_valid:
        frames = jnp.pad(frames, ((0, 0), (0, n_pad - n_valid), (0, 0)))

    kernel = functools.partial(_stft_loss_kernel, tm=tm, k_pad=k_pad,
                               nb_pad=nb_pad)

    # --- BlockSpecs -------------------------------------------------------
    basis_bytes = k_pad * (2 * nb_pad) * 2
    single_buffer_basis = basis_bytes > (4 << 20)
    if single_buffer_basis:
        # Constant index_map -> double-buffering buys nothing; required to
        # fit fft>=4096 bases under v7x's 64 MiB/TC.
        basis_spec = pl.BlockSpec((k_pad, 2 * nb_pad), lambda i: (0, 0),
                                  pipeline_mode=pl.Buffered(1))
    else:
        basis_spec = pl.BlockSpec((k_pad, 2 * nb_pad), lambda i: (0, 0))

    # --- VMEM budget (leave headroom below physical capacity) -------------
    tile_bytes = 2 * tm * k_pad * 2                    # one (2,tm,k_pad) bf16
    interm_bytes = 3 * (2 * tm) * (2 * nb_pad) * 4     # f32 spectra / squares
    vmem_need = ((1 if single_buffer_basis else 2) * basis_bytes
                 + 2 * tile_bytes + interm_bytes + (2 << 20))
    head = max(vmem_cap - (8 << 20), 32 << 20)
    vmem_limit = int(min(max(vmem_need, 32 << 20), head))

    cost = pl.CostEstimate(
        flops=2 * (2 * n_pad) * k_pad * (2 * nb_pad),
        transcendentals=3 * n_pad * nb_pad,
        bytes_accessed=(2 * n_pad * k_pad * 2) + basis_bytes
        + num_tiles * 8 * 128 * 4,
    )

    partials = pl.pallas_call(
        kernel,
        out_shape=jax.ShapeDtypeStruct((num_tiles * 8, 128), jnp.float32),
        grid=(num_tiles,),
        in_specs=[
            pl.BlockSpec((2, tm, k_pad), lambda i: (0, i, 0)),
            basis_spec,
        ],
        out_specs=pl.BlockSpec((8, 128), lambda i: (i, 0)),
        compiler_params=pltpu.CompilerParams(
            dimension_semantics=("parallel",),
            vmem_limit_bytes=vmem_limit,
        ),
        cost_estimate=cost,
    )(frames, basis)

    sums = jnp.sum(partials, axis=0)                          # (128,)
    n_elems = n_valid * n_bins
    pad_cells = n_pad * nb_pad - n_elems
    # Unmasked kernel: every padded cell adds exactly 1e-6 to ||y||_F^2.
    y_fro_sq = jnp.maximum(sums[1] - jnp.float32(1e-6 * pad_cells),
                           jnp.float32(1e-6 * n_elems))
    sc_loss = jnp.sqrt(jnp.maximum(sums[0], 0.0)) / jnp.sqrt(y_fro_sq)
    mag_loss = sums[2] / jnp.float32(n_elems)
    return sc_loss, mag_loss


def multi_resolution_stft_loss(x, y, resolutions):
    sc_loss = jnp.float32(0.0)
    mag_loss = jnp.float32(0.0)
    for fs, ss, wl in resolutions:
        sc_l, mag_l = stft_loss(x, y, fs, ss, wl)
        sc_loss = sc_loss + sc_l
        mag_loss = mag_loss + mag_l
    n = float(len(resolutions))
    return sc_loss / n, mag_loss / n


if __name__ == "__main__":
    # Small, deterministic example consistent with the module's (B, T) signals.
    key = jax.random.PRNGKey(0)
    kx, ky = jax.random.split(key)
    B, T = 2, 256
    x = jax.random.normal(kx, (B, T), dtype=jnp.float32)
    y = jax.random.normal(ky, (B, T), dtype=jnp.float32)

    # (fft_size, hop_size, win_length) per resolution, scaled down for the demo.
    resolutions = [(64, 16, 32), (128, 32, 64), (32, 8, 16)]

    sc_loss, mag_loss = multi_resolution_stft_loss(x, y, resolutions)
    jax.block_until_ready((sc_loss, mag_loss))
    print("KERNEL_OK")
</pallas_src>

<mosaic_0001>
module attributes {stable_mosaic.version = 11 : i64} {
  func.func @_stft_loss_kernel(%arg0: i32, %arg1: memref<2x32x128xbf16, #tpu.memory_space<vmem>>, %arg2: memref<128x256xbf16, #tpu.memory_space<vmem>>, %arg3: memref<8x128xf32, #tpu.memory_space<vmem>>) attributes {dimension_semantics = [#tpu.dimension_semantics<parallel>], iteration_bounds = array<i64: 2>, scalar_prefetch = 0 : i64, scratch_operands = 0 : i64, tpu.core_type = #tpu.core_type<tc>, window_params = [{transform_indices = @transform_0, window_bounds = array<i64: 2, 32, 128>}, {pipeline_mode = #tpu.pipeline_mode<synchronous>, transform_indices = @transform_1, window_bounds = array<i64: 128, 256>}, {transform_indices = @transform_2, window_bounds = array<i64: 8, 128>}]} {
    %c0 = arith.constant 0 : index
    %c0_0 = arith.constant 0 : index
    %c0_1 = arith.constant 0 : index
    %0 = vector.load %arg1[%c0, %c0_0, %c0_1] : memref<2x32x128xbf16, #tpu.memory_space<vmem>>, vector<2x32x128xbf16>
    %1 = vector.shape_cast %0 : vector<2x32x128xbf16> to vector<64x128xbf16>
    %c0_2 = arith.constant 0 : index
    %c0_3 = arith.constant 0 : index
    %2 = vector.load %arg2[%c0_2, %c0_3] : memref<128x256xbf16, #tpu.memory_space<vmem>>, vector<128x256xbf16>
    %cst = arith.constant dense<0.000000e+00> : vector<64x256xf32>
    %3 = tpu.matmul %1, %2, %cst {dimension_numbers = #tpu.dot_dimension_numbers<[1], [0], [0], [1], [0, 0, 1, 1], [], []>} : vector<64x128xbf16>, vector<128x256xbf16>, vector<64x256xf32> -> vector<64x256xf32>
    %4 = arith.mulf %3, %3 : vector<64x256xf32>
    %5 = vector.extract_strided_slice %4 {offsets = [0, 0], sizes = [64, 128], strides = [1, 1]} : vector<64x256xf32> to vector<64x128xf32>
    %6 = vector.extract_strided_slice %4 {offsets = [0, 128], sizes = [64, 128], strides = [1, 1]} : vector<64x256xf32> to vector<64x128xf32>
    %7 = arith.addf %5, %6 : vector<64x128xf32>
    %cst_4 = arith.constant 9.99999997E-7 : f32
    %8 = vector.broadcast %cst_4 : f32 to vector<64x128xf32>
    %9 = arith.maximumf %7, %8 : vector<64x128xf32>
    %10 = vector.extract_strided_slice %9 {offsets = [0, 0], sizes = [32, 128], strides = [1, 1]} : vector<64x128xf32> to vector<32x128xf32>
    %11 = vector.extract_strided_slice %9 {offsets = [32, 0], sizes = [32, 128], strides = [1, 1]} : vector<64x128xf32> to vector<32x128xf32>
    %12 = arith.mulf %10, %11 : vector<32x128xf32>
    %13 = math.sqrt %12 : vector<32x128xf32>
    %14 = arith.addf %10, %11 : vector<32x128xf32>
    %cst_5 = arith.constant 2.000000e+00 : f32
    %15 = vector.broadcast %cst_5 : f32 to vector<32x128xf32>
    %16 = arith.mulf %15, %13 : vector<32x128xf32>
    %17 = arith.subf %14, %16 : vector<32x128xf32>
    %18 = vector.shape_cast %17 : vector<32x128xf32> to vector<1x32x128xf32>
    %cst_6 = arith.constant dense<0.000000e+00> : vector<1xf32>
    %19 = vector.multi_reduction <add>, %18, %cst_6 [1, 2] : vector<1x32x128xf32> to vector<1xf32>
    %20 = vector.shape_cast %19 : vector<1xf32> to vector<1x1x1xf32>
    %21 = vector.extract %20[0, 0, 0] : f32 from vector<1x1x1xf32>
    %22 = vector.shape_cast %11 : vector<32x128xf32> to vector<1x32x128xf32>
    %cst_7 = arith.constant dense<0.000000e+00> : vector<1xf32>
    %23 = vector.multi_reduction <add>, %22, %cst_7 [1, 2] : vector<1x32x128xf32> to vector<1xf32>
    %24 = vector.shape_cast %23 : vector<1xf32> to vector<1x1x1xf32>
    %25 = vector.extract %24[0, 0, 0] : f32 from vector<1x1x1xf32>
    %26 = math.log %11 : vector<32x128xf32>
    %27 = math.log %10 : vector<32x128xf32>
    %28 = arith.subf %26, %27 : vector<32x128xf32>
    %29 = math.absf %28 : vector<32x128xf32>
    %30 = vector.shape_cast %29 : vector<32x128xf32> to vector<1x32x128xf32>
    %cst_8 = arith.constant dense<0.000000e+00> : vector<1xf32>
    %31 = vector.multi_reduction <add>, %30, %cst_8 [1, 2] : vector<1x32x128xf32> to vector<1xf32>
    %32 = vector.shape_cast %31 : vector<1xf32> to vector<1x1x1xf32>
    %33 = vector.extract %32[0, 0, 0] : f32 from vector<1x1x1xf32>
    %cst_9 = arith.constant 5.000000e-01 : f32
    %34 = arith.mulf %cst_9, %33 : f32
    %35 = tpu.iota {dimensions = array<i32: 0>} : vector<8x128xi32>
    %36 = tpu.iota {dimensions = array<i32: 1>} : vector<8x128xi32>
    %c0_i32 = arith.constant 0 : i32
    %37 = vector.broadcast %c0_i32 : i32 to vector<8x128xi32>
    %38 = arith.cmpi eq, %35, %37 : vector<8x128xi32>
    %c0_i32_10 = arith.constant 0 : i32
    %39 = vector.broadcast %c0_i32_10 : i32 to vector<8x128xi32>
    %40 = arith.cmpi eq, %36, %39 : vector<8x128xi32>
    %41 = arith.andi %38, %40 : vector<8x128xi1>
    %cst_11 = arith.constant 0.000000e+00 : f32
    %42 = vector.broadcast %21 : f32 to vector<8x128xf32>
    %43 = vector.broadcast %cst_11 : f32 to vector<8x128xf32>
    %44 = arith.select %41, %42, %43 : vector<8x128xi1>, vector<8x128xf32>
    %c1_i32 = arith.constant 1 : i32
    %45 = vector.broadcast %c1_i32 : i32 to vector<8x128xi32>
    %46 = arith.cmpi eq, %36, %45 : vector<8x128xi32>
    %47 = arith.andi %38, %46 : vector<8x128xi1>
    %cst_12 = arith.constant 0.000000e+00 : f32
    %48 = vector.broadcast %25 : f32 to vector<8x128xf32>
    %49 = vector.broadcast %cst_12 : f32 to vector<8x128xf32>
    %50 = arith.select %47, %48, %49 : vector<8x128xi1>, vector<8x128xf32>
    %51 = arith.addf %44, %50 : vector<8x128xf32>
    %c2_i32 = arith.constant 2 : i32
    %52 = vector.broadcast %c2_i32 : i32 to vector<8x128xi32>
    %53 = arith.cmpi eq, %36, %52 : vector<8x128xi32>
    %54 = arith.andi %38, %53 : vector<8x128xi1>
    %cst_13 = arith.constant 0.000000e+00 : f32
    %55 = vector.broadcast %34 : f32 to vector<8x128xf32>
    %56 = vector.broadcast %cst_13 : f32 to vector<8x128xf32>
    %57 = arith.select %54, %55, %56 : vector<8x128xi1>, vector<8x128xf32>
    %58 = arith.addf %51, %57 : vector<8x128xf32>
    %c0_14 = arith.constant 0 : index
    %c0_15 = arith.constant 0 : index
    %59 = vector.load %arg3[%c0_14, %c0_15] : memref<8x128xf32, #tpu.memory_space<vmem>>, vector<8x128xf32>
    tpu.vector_store %arg3[%c0_14, %c0_15], %58 {strides = array<i32>} : memref<8x128xf32, #tpu.memory_space<vmem>>, vector<8x128xf32>,
    return
  }
  func.func @transform_0(%arg0: i32) -> (i32, i32, i32) {
    %c0_i32 = arith.constant 0 : i32
    %c0_i32_0 = arith.constant 0 : i32
    %c0_i32_1 = arith.constant 0 : i32
    return %c0_i32, %arg0, %c0_i32_0 : i32, i32, i32
  }
  func.func @transform_1(%arg0: i32) -> (i32, i32) {
    %c0_i32 = arith.constant 0 : i32
    %c0_i32_0 = arith.constant 0 : i32
    %c0_i32_1 = arith.constant 0 : i32
    return %c0_i32, %c0_i32_0 : i32, i32
  }
  func.func @transform_2(%arg0: i32) -> (i32, i32) {
    %c0_i32 = arith.constant 0 : i32
    %c0_i32_0 = arith.constant 0 : i32
    return %arg0, %c0_i32 : i32, i32
  }
}

</mosaic_0001>

<llo_original>
// kernel: tpu_custom_call.1
$region0: #{tpu_custom_call.1}
  #allocation0 [shape = 'u32[]', space=smem, size = 0x4, offset = 0x4, fixed_abs, tag = 'smem constant byte address 0x4 - core index']
  #allocation1 [shape = 'u32[144,128]{1,0:T(1,128)}', space=vmem, size = 0x12000, scoped, tag = 'internal scratch']
  #allocation8 [shape = 's32[]', space=sflag, size = 0x4, offset = 0, fixed_abs, tag = 'sflag constant byte address 0x0 - dummy sync flag']
  %s0 = inlined_call_operand.hbm [shape: bf16[2,64,128], index: 0, kind: input, shape index: {}]
  %s1 = inlined_call_operand.hbm [shape: bf16[128,256], index: 1, kind: input, shape index: {}]
  %s2 = inlined_call_operand.hbm [shape: f32[16,128], index: 2, kind: output, shape index: {}]
  %s3 = sld [smem:[#allocation0]]
  $region49: #{tpu_custom_call.1} parent=0
    _
  %s5 = ssub.s32 1, %s3
  %s6 = scalar_select 0, %s5, %s3
  $region1: #{tpu_custom_call.1} parent=0
    #allocation2 [shape = 'u8[32768]{0}', space=vmem, size = 0x8000, scoped, tag = 'input window, operand 0']
    #allocation3 [shape = 's32[2]{0}', space=sflag, size = 0x8, scoped, tag = 'scoped memory for tpu_custom_call.1']
    #allocation4 [shape = 's32[2]{0}', space=sflag, size = 0x8, scoped, tag = 'scoped memory for tpu_custom_call.1']
    #allocation5 [shape = 'u8[65536]{0}', space=vmem, size = 0x10000, scoped, tag = 'input window, operand 1, single buffered']
    #allocation6 [shape = 's32[1]{0}', space=sflag, size = 0x4, scoped, tag = 'scoped memory for tpu_custom_call.1']
    #allocation7 [shape = 'u8[8192]{0}', space=vmem, size = 0x2000, scoped, tag = 'output window, operand 0']
    %7 = vsyncpa [#allocation3], 0
    %s8 = scalar_lea.sflag [#allocation3], 1
    %9 = vsyncpa %s8, 0
    %10 = vsyncpa [#allocation6], 0
    %11 = vsyncpa [#allocation4], 0
    %s12 = scalar_lea.sflag [#allocation4], 1
    %13 = vsyncpa %s12, 0
    loop: start=0, step=1, limit=4
    $region2: #{tpu_custom_call.1} parent=1 // loop_pre_header
      _
    $region3: #{tpu_custom_call.1} parent=1 // loop_header
      %s15 = sphi 0, %s19
      %p16 = scmp.ge.s32.totalorder %s15, 4
      %s25 = sphi 0, %s27
      %s28 = sphi 0, %s25
      %s29 = sphi 0, %s28
      %s45 = sphi 0, %s29
      %s49 = sphi 0, %s49
      %s51 = sphi 0, %s49
      %s52 = sphi 0, %s51
      %s66 = sphi 0, %s52
      %s72 = sphi 0, %s74
      %s75 = sphi 0, %s72
      %s76 = sphi 0, %s75
      %s92 = sphi 0, %s76
    $region4: #{tpu_custom_call.1} parent=1 // loop_header_branch
      %18 = sbr.rel (%p16) target = $region8
    $region5: #{tpu_custom_call.1} parent=1 // loop_body
      %s20 = ssub.s32 %s15, 1
      %s21 = ssub.s32 %s15, 2
      %s22 = sadd.s32 %s15, 1
      %s23 = ssub.s32 %s15, %s22
      %p24 = scmp.eq.s32.totalorder %s23, 0
      %s26 = sadd.s32 %s25, 1
      %s27 = scalar_select %p24, %s25, %s26
      %p30 = pneg %p24
      %p31 = scmp.eq.s32.totalorder %s15, 1
      %p32 = por %p30, %p31
      %p33 = scmp.ne.s32.totalorder %s25, %s28
      %p34 = scmp.eq.s32.totalorder %s15, 0
      %p35 = por %p33, %p34
      %p36 = scmp.ne.s32.totalorder %s25, %s28
      %p37 = scmp.eq.s32.totalorder %s20, 1
      %p38 = por %p36, %p37
      %p39 = scmp.ne.s32.totalorder %s28, %s29
      %p40 = scmp.eq.s32.totalorder %s20, 0
      %p41 = por %p39, %p40
      %p42 = scmp.ne.s32.totalorder %s28, %s29
      %p43 = scmp.eq.s32.totalorder %s21, 1
      %p44 = por %p42, %p43
      %p46 = scmp.ne.s32.totalorder %s29, %s45
      %p47 = scmp.eq.s32.totalorder %s21, 0
      %p48 = por %p46, %p47
      %s50 = sadd.s32 %s49, 1
      %p53 = scmp.eq.s32.totalorder %s15, 1
      %p54 = scmp.ne.s32.totalorder %s49, %s51
      %p55 = scmp.eq.s32.totalorder %s15, 0
      %p56 = por %p54, %p55
      %p57 = scmp.ne.s32.totalorder %s49, %s51
      %p58 = scmp.eq.s32.totalorder %s20, 1
      %p59 = por %p57, %p58
      %p60 = scmp.ne.s32.totalorder %s51, %s52
      %p61 = scmp.eq.s32.totalorder %s20, 0
      %p62 = por %p60, %p61
      %p63 = scmp.ne.s32.totalorder %s51, %s52
      %p64 = scmp.eq.s32.totalorder %s21, 1
      %p65 = por %p63, %p64
      %p67 = scmp.ne.s32.totalorder %s52, %s66
      %p68 = scmp.eq.s32.totalorder %s21, 0
      %p69 = por %p67, %p68
      %s70 = ssub.s32 %s15, %s22
      %p71 = scmp.eq.s32.totalorder %s70, 0
      %s73 = sadd.s32 %s72, 1
      %s74 = scalar_select %p71, %s72, %s73
      %p77 = pneg %p71
      %p78 = scmp.eq.s32.totalorder %s15, 1
      %p79 = por %p77, %p78
      %p80 = scmp.ne.s32.totalorder %s72, %s75
      %p81 = scmp.eq.s32.totalorder %s15, 0
      %p82 = por %p80, %p81
      %p83 = scmp.ne.s32.totalorder %s72, %s75
      %p84 = scmp.eq.s32.totalorder %s20, 1
      %p85 = por %p83, %p84
      %p86 = scmp.ne.s32.totalorder %s75, %s76
      %p87 = scmp.eq.s32.totalorder %s20, 0
      %p88 = por %p86, %p87
      %p89 = scmp.ne.s32.totalorder %s75, %s76
      %p90 = scmp.eq.s32.totalorder %s21, 1
      %p91 = por %p89, %p90
      %p93 = scmp.ne.s32.totalorder %s76, %s92
      %p94 = scmp.eq.s32.totalorder %s21, 0
      %p95 = por %p93, %p94
      %p96 = scmp.le.s32.totalorder 1, %s15
      %p97 = scmp.lt.s32.totalorder %s15, 3
      %p98 = pnand %p96, %p97
      %p99 = pneg %p98
      // Predicated region
      $region9: #{tpu_custom_call.1} parent=5 // pred_check
        _
      $region10: #{tpu_custom_call.1} parent=5 // pred_check_branch
        %101 = sbr.rel (%p98) target = $region12
      $region11: #{tpu_custom_call.1} parent=5 // pred_region
        %s102 = ssub.s32 %s15, 1
        // Predicated region
        $region13: #{tpu_custom_call.1} parent=11 // pred_check
          %p103 = pneg %p62
        $region14: #{tpu_custom_call.1} parent=11 // pred_check_branch
          %105 = sbr.rel (%p103) target = $region16
        $region15: #{tpu_custom_call.1} parent=11 // pred_region
          %s107 = ssub.s32 2048, 2048
          %108 = vsyncadd [#allocation6], %s107
          %s109 = sshll.u32 [#allocation5], 4
          %s110 = int_to_ptr.vmem [resolvable:$true] %s109
          %115 = dma.hbm_to_vmem [thread:$0]  %s1, 2048, %s110, [#allocation6], 128, 128, 8
        $region16: #{tpu_custom_call.1} parent=11 // pred_fallthru
          _
      $region12: #{tpu_custom_call.1} parent=5 // pred_fallthru
        _
      %p116 = scmp.lt.s32.totalorder %s15, 2
      // Predicated region
      $region17: #{tpu_custom_call.1} parent=5 // pred_check
        %p117 = pneg %p116
      $region18: #{tpu_custom_call.1} parent=5 // pred_check_branch
        %119 = sbr.rel (%p117) target = $region20
      $region19: #{tpu_custom_call.1} parent=5 // pred_region
        // Predicated region
        $region21: #{tpu_custom_call.1} parent=19 // pred_check
          %p120 = pneg %p35
        $region22: #{tpu_custom_call.1} parent=19 // pred_check_branch
          %122 = sbr.rel (%p120) target = $region24
        $region23: #{tpu_custom_call.1} parent=19 // pred_region
          #allocation9 [shape = 'u32[6]{0}', space=smem, size = 0x18, scoped, tag = 'DMA stride descriptor']
          %s123 = sand.u32 %s25, 1
          %s124 = scalar_lea.sflag [#allocation3], %s123
          %s125 = sand.u32 %s25, 1
          %s126 = smul.addr %s125, 32
          %s127 = scalar_lea.vmem [#allocation2], %s126
          %s128 = smul.u32 4, %s15
          %s130 = ssub.s32 512, 512
          %131 = vsyncadd %s124, %s130
          %s132 = smul.addr %s128, 64
          %s133 = scalar_lea.hbm %s0, %s132
          %s135 = sshll.u32 1, 14
          %s136 = sxor.u32 4294967295, %s135
          %s138 = sld [smem:[#allocation0]]
          %s139 = sadd.s32 2, %s138
          %s141 = sshll.u32 7, 26
          %s142 = sxor.u32 4294967295, %s141
          %s143 = sand.u32 0, %s142
          %s144 = sshll.u32 %s139, 26
          %s145 = sor.u32 %s143, %s144
          %s146 = sshll.u32 %s127, 4
          %s147 = int_to_ptr.vmem [resolvable:$true] %s146
          %153 = sst [smem:[#allocation9]] 512
          %s154 = scalar_lea.smem [#allocation9], 1
          %155 = sst [smem:[%s154]] 256
          %s156 = scalar_lea.smem [#allocation9], 2
          %157 = sst [smem:[%s156]] 4
          %s158 = scalar_lea.smem [#allocation9], 3
          %159 = sst [smem:[%s158]] 64
          %s160 = scalar_lea.smem [#allocation9], 4
          %161 = sst [smem:[%s160]] 64
          %s162 = scalar_lea.smem [#allocation9], 5
          %163 = sst [smem:[%s162]] 4
          %165 = dma.general %s133, 512, %s147, %s124, 131072, [#allocation9], %s145, 0
        $region24: #{tpu_custom_call.1} parent=19 // pred_fallthru
          _
      $region20: #{tpu_custom_call.1} parent=5 // pred_fallthru
        _
      %p166 = scmp.le.s32.totalorder 1, %s15
      %p167 = scmp.lt.s32.totalorder %s15, 3
      %p168 = pnand %p166, %p167
      %p169 = pneg %p168
      // Predicated region
      $region25: #{tpu_custom_call.1} parent=5 // pred_check
        _
      $region26: #{tpu_custom_call.1} parent=5 // pred_check_branch
        %171 = sbr.rel (%p168) target = $region28
      $region27: #{tpu_custom_call.1} parent=5 // pred_region
        %s172 = ssub.s32 %s15, 1
        %s173 = sand.u32 %s28, 1
        %s174 = scalar_lea.sflag [#allocation3], %s173
        %s175 = sand.u32 %s28, 1
        %s176 = smul.addr %s175, 32
        %s177 = scalar_lea.vmem [#allocation2], %s176
        // Predicated region
        $region29: #{tpu_custom_call.1} parent=27 // pred_check
          %p178 = pneg %p41
        $region30: #{tpu_custom_call.1} parent=27 // pred_check_branch
          %180 = sbr.rel (%p178) target = $region32
        $region31: #{tpu_custom_call.1} parent=27 // pred_region
          %181 = dma.done %s174, 512
        $region32: #{tpu_custom_call.1} parent=27 // pred_fallthru
          _
        // Predicated region
        $region33: #{tpu_custom_call.1} parent=27 // pred_check
          %p182 = pneg %p62
        $region34: #{tpu_custom_call.1} parent=27 // pred_check_branch
          %184 = sbr.rel (%p182) target = $region36
        $region35: #{tpu_custom_call.1} parent=27 // pred_region
          %185 = dma.done [#allocation6], 2048
        $region36: #{tpu_custom_call.1} parent=27 // pred_fallthru
          _
        %s186 = sand.u32 %s28, 1
        %s187 = scalar_lea.sflag [#allocation3], %s186
        %s188 = sand.u32 %s28, 1
        %s189 = smul.addr %s188, 32
        %s190 = scalar_lea.vmem [#allocation2], %s189
        %p191 = pneg %p41
        %p192 = pneg %p38
        %p193 = pneg %p62
        %p194 = pneg %p59
        %p195 = pneg %p88
        %p196 = pneg %p85
        %s197 = sand.u32 %s75, 1
        %s198 = scalar_lea.sflag [#allocation4], %s197
        %s199 = sand.u32 %s75, 1
        %s200 = smul.addr %s199, 8
        %s201 = scalar_lea.vmem [#allocation7], %s200
        %s202 = smul.u32 4, %s20
        %v204 = vld [vmem:[%s177] sm:$0xf]
        %v205 = vld [vmem:[%s177 + $0x4] sm:$0xf]
        %v206 = vld [vmem:[%s177 + $0x8] sm:$0xf]
        %v207 = vld [vmem:[%s177 + $0xc] sm:$0xf]
        %v208 = vld [vmem:[%s177 + $0x10] sm:$0xf]
        %v209 = vld [vmem:[%s177 + $0x14] sm:$0xf]
        %v210 = vld [vmem:[%s177 + $0x18] sm:$0xf]
        %v211 = vld [vmem:[%s177 + $0x1c] sm:$0xf]
        %v212 = vld [vmem:[#allocation5] sm:$0xff]
        %v213 = vld [vmem:[#allocation5 + $0x8] sm:$0xff]
        %v214 = vld [vmem:[#allocation5 + $0x10] sm:$0xff]
        %v215 = vld [vmem:[#allocation5 + $0x18] sm:$0xff]
        %v216 = vld [vmem:[#allocation5 + $0x20] sm:$0xff]
        %v217 = vld [vmem:[#allocation5 + $0x28] sm:$0xff]
        %v218 = vld [vmem:[#allocation5 + $0x30] sm:$0xff]
        %v219 = vld [vmem:[#allocation5 + $0x38] sm:$0xff]
        %v220 = vld [vmem:[#allocation5 + $0x40] sm:$0xff]
        %v221 = vld [vmem:[#allocation5 + $0x48] sm:$0xff]
        %v222 = vld [vmem:[#allocation5 + $0x50] sm:$0xff]
        %v223 = vld [vmem:[#allocation5 + $0x58] sm:$0xff]
        %v224 = vld [vmem:[#allocation5 + $0x60] sm:$0xff]
        %v225 = vld [vmem:[#allocation5 + $0x68] sm:$0xff]
        %v226 = vld [vmem:[#allocation5 + $0x70] sm:$0xff]
        %v227 = vld [vmem:[#allocation5 + $0x78] sm:$0xff]
        %v236 = vunpack.c.l.b16 %v204
        %v237 = vunpack.c.l.b16 %v205
        %v238 = vunpack.c.l.b16 %v206
        %v239 = vunpack.c.l.b16 %v207
        %v240 = vunpack.c.l.b16 %v208
        %v241 = vunpack.c.l.b16 %v209
        %v242 = vunpack.c.l.b16 %v210
        %v243 = vunpack.c.l.b16 %v211
        %v244 = vpack.c.b16 %v237, %v236
        %v245 = vpack.c.b16 %v239, %v238
        %v246 = vpack.c.b16 %v241, %v240
        %v247 = vpack.c.b16 %v243, %v242
        %v268 = vunpack.c.l.b16 %v212
        %v269 = vunpack.c.h.b16 %v212
        %v270 = vunpack.c.l.b16 %v213
        %v271 = vunpack.c.h.b16 %v213
        %v272 = vunpack.c.l.b16 %v214
        %v273 = vunpack.c.h.b16 %v214
        %v274 = vunpack.c.l.b16 %v215
        %v275 = vunpack.c.h.b16 %v215
        %v276 = vunpack.c.l.b16 %v216
        %v277 = vunpack.c.h.b16 %v216
        %v278 = vunpack.c.l.b16 %v217
        %v279 = vunpack.c.h.b16 %v217
        %v280 = vunpack.c.l.b16 %v218
        %v281 = vunpack.c.h.b16 %v218
        %v282 = vunpack.c.l.b16 %v219
        %v283 = vunpack.c.h.b16 %v219
        %v284 = vunpack.c.l.b16 %v220
        %v285 = vunpack.c.h.b16 %v220
        %v286 = vunpack.c.l.b16 %v221
        %v287 = vunpack.c.h.b16 %v221
        %v288 = vunpack.c.l.b16 %v222
        %v289 = vunpack.c.h.b16 %v222
        %v290 = vunpack.c.l.b16 %v223
        %v291 = vunpack.c.h.b16 %v223
        %v292 = vunpack.c.l.b16 %v224
        %v293 = vunpack.c.h.b16 %v224
        %v294 = vunpack.c.l.b16 %v225
        %v295 = vunpack.c.h.b16 %v225
        %v296 = vunpack.c.l.b16 %v226
        %v297 = vunpack.c.h.b16 %v226
        %v298 = vunpack.c.l.b16 %v227
        %v299 = vunpack.c.h.b16 %v227
        %v300 = vpack.c.b16 %v270, %v268
        %v301 = vpack.c.b16 %v271, %v269
        %v302 = vpack.c.b16 %v274, %v272
        %v303 = vpack.c.b16 %v275, %v273
        %v304 = vpack.c.b16 %v278, %v276
        %v305 = vpack.c.b16 %v279, %v277
        %v306 = vpack.c.b16 %v282, %v280
        %v307 = vpack.c.b16 %v283, %v281
        %v308 = vpack.c.b16 %v286, %v284
        %v309 = vpack.c.b16 %v287, %v285
        %v310 = vpack.c.b16 %v290, %v288
        %v311 = vpack.c.b16 %v291, %v289
        %v312 = vpack.c.b16 %v294, %v292
        %v313 = vpack.c.b16 %v295, %v293
        %v314 = vpack.c.b16 %v298, %v296
        %v315 = vpack.c.b16 %v299, %v297
        %332 = vmatprep.subr.bf16.mxu0 %v315
        %333 = vmatpush1.bf16.msra.mxu0 %v314
        %334 = vmatprep.subr.bf16.mxu0 %v313
        %335 = vmatpush1.bf16.msra.mxu0 %v312
        %336 = vmatprep.subr.bf16.mxu0 %v311
        %337 = vmatpush1.bf16.msra.mxu0 %v310
        %338 = vmatprep.subr.bf16.mxu0 %v309
        %339 = vmatpush1.bf16.msra.mxu0 %v308
        %340 = vmatprep.subr.bf16.mxu0 %v307
        %341 = vmatpush1.bf16.msra.mxu0 %v306
        %342 = vmatprep.subr.bf16.mxu0 %v305
        %343 = vmatpush1.bf16.msra.mxu0 %v304
        %344 = vmatprep.subr.bf16.mxu0 %v303
        %345 = vmatpush1.bf16.msra.mxu0 %v302
        %346 = vmatprep.subr.bf16.mxu0 %v301
        %347 = vmatpush1.bf16.msra.mxu0 %v300
        %348 = vmatprep.subr.bf16.mxu0 0
        %349 = vmatpush2.bf16.msra.mxu0 0
        %350 = vmatprep.subr.bf16.mxu0 0
        %351 = vmatpush2.bf16.msra.mxu0 0
        %352 = vmatprep.subr.bf16.mxu0 0
        %353 = vmatpush2.bf16.msra.mxu0 0
        %354 = vmatprep.subr.bf16.mxu0 0
        %355 = vmatpush2.bf16.msra.mxu0 0
        %356 = vmatprep.subr.bf16.mxu0 0
        %357 = vmatpush2.bf16.msra.mxu0 0
        %358 = vmatprep.subr.bf16.mxu0 0
        %359 = vmatpush2.bf16.msra.mxu0 0
        %360 = vmatprep.subr.bf16.mxu0 0
        %361 = vmatpush2.bf16.msra.mxu0 0
        %362 = vmatprep.subr.bf16.mxu0 0
        %363 = vmatpush2.bf16.msra.mxu0 0
        %364 = vmatprep.mubr.bf16.mxu0 0
        %365 = vmatmul.mubr.bf16.gmra.mxu0 %v244
        %v366 = vpop.f32.mrf.mxu0
        %v367 = vadd.f32 0.0, %v366
        %v368 = vpop.f32.mrf.mxu0
        %v369 = vadd.f32 0.0, %v368
        %v370 = vpop.f32.mrf.mxu0
        %v371 = vadd.f32 0.0, %v370
        %v372 = vpop.f32.mrf.mxu0
        %v373 = vadd.f32 0.0, %v372
        %374 = vmatprep.mubr.bf16.mxu0 0
        %375 = vmatmul.mubr.bf16.gmra.mxu0 %v245
        %v376 = vpop.f32.mrf.mxu0
        %v377 = vadd.f32 0.0, %v376
        %v378 = vpop.f32.mrf.mxu0
        %v379 = vadd.f32 0.0, %v378
        %v380 = vpop.f32.mrf.mxu0
        %v381 = vadd.f32 0.0, %v380
        %v382 = vpop.f32.mrf.mxu0
        %v383 = vadd.f32 0.0, %v382
        %384 = vmatprep.mubr.bf16.mxu0 0
        %385 = vmatmul.mubr.bf16.gmra.mxu0 %v246
        %v386 = vpop.f32.mrf.mxu0
        %v387 = vadd.f32 0.0, %v386
        %v388 = vpop.f32.mrf.mxu0
        %v389 = vadd.f32 0.0, %v388
        %v390 = vpop.f32.mrf.mxu0
        %v391 = vadd.f32 0.0, %v390
        %v392 = vpop.f32.mrf.mxu0
        %v393 = vadd.f32 0.0, %v392
        %394 = vmatprep.mubr.bf16.mxu0 0
        %395 = vmatmul.mubr.bf16.gmra.mxu0 %v247
        %v396 = vpop.f32.mrf.mxu0
        %v397 = vadd.f32 0.0, %v396
        %v398 = vpop.f32.mrf.mxu0
        %v399 = vadd.f32 0.0, %v398
        %v400 = vpop.f32.mrf.mxu0
        %v401 = vadd.f32 0.0, %v400
        %v402 = vpop.f32.mrf.mxu0
        %v403 = vadd.f32 0.0, %v402
        %404 = vdwg.mxu0
        %v405 = vmul.f32 %v367, %v367
        %v406 = vmul.f32 %v369, %v369
        %v407 = vmul.f32 %v371, %v371
        %v408 = vmul.f32 %v373, %v373
        %v409 = vmul.f32 %v377, %v377
        %v410 = vmul.f32 %v379, %v379
        %v411 = vmul.f32 %v381, %v381
        %v412 = vmul.f32 %v383, %v383
        %v413 = vmul.f32 %v387, %v387
        %v414 = vmul.f32 %v389, %v389
        %v415 = vmul.f32 %v391, %v391
        %v416 = vmul.f32 %v393, %v393
        %v417 = vmul.f32 %v397, %v397
        %v418 = vmul.f32 %v399, %v399
        %v419 = vmul.f32 %v401, %v401
        %v420 = vmul.f32 %v403, %v403
        %v421 = vadd.f32 %v405, %v406
        %v422 = vadd.f32 %v407, %v408
        %v423 = vadd.f32 %v409, %v410
        %v424 = vadd.f32 %v411, %v412
        %v425 = vadd.f32 %v413, %v414
        %v426 = vadd.f32 %v415, %v416
        %v427 = vadd.f32 %v417, %v418
        %v428 = vadd.f32 %v419, %v420
        %v429 = vmax.f32 %v421, 1e-06
        %v430 = vmax.f32 %v422, 1e-06
        %v431 = vmax.f32 %v423, 1e-06
        %v432 = vmax.f32 %v424, 1e-06
        %v433 = vmax.f32 %v425, 1e-06
        %v434 = vmax.f32 %v426, 1e-06
        %v435 = vmax.f32 %v427, 1e-06
        %v436 = vmax.f32 %v428, 1e-06
        %v437 = vmul.f32 %v429, %v433
        %v438 = vmul.f32 %v430, %v434
        %v439 = vmul.f32 %v431, %v435
        %v440 = vmul.f32 %v432, %v436
        %v441 = vrsqrt.pop %v437
        %v442 = vmul.f32 %v437, %v441
        %vm443 = vcmp.eq.f32.partialorder %v437, inf
        %v444 = vsel %vm443, %v437, %v442
        %vm445 = vcmp.eq.f32.partialorder %v437, 0.0
        %v446 = vand.u32 %v437, 2147483648
        %v447 = vsel %vm445, %v446, %v444
        %v448 = vrsqrt.pop %v438
        %v449 = vmul.f32 %v438, %v448
        %vm450 = vcmp.eq.f32.partialorder %v438, inf
        %v451 = vsel %vm450, %v438, %v449
        %vm452 = vcmp.eq.f32.partialorder %v438, 0.0
        %v453 = vand.u32 %v438, 2147483648
        %v454 = vsel %vm452, %v453, %v451
        %v455 = vrsqrt.pop %v439
        %v456 = vmul.f32 %v439, %v455
        %vm457 = vcmp.eq.f32.partialorder %v439, inf
        %v458 = vsel %vm457, %v439, %v456
        %vm459 = vcmp.eq.f32.partialorder %v439, 0.0
        %v460 = vand.u32 %v439, 2147483648
        %v461 = vsel %vm459, %v460, %v458
        %v462 = vrsqrt.pop %v440
        %v463 = vmul.f32 %v440, %v462
        %vm464 = vcmp.eq.f32.partialorder %v440, inf
        %v465 = vsel %vm464, %v440, %v463
        %vm466 = vcmp.eq.f32.partialorder %v440, 0.0
        %v467 = vand.u32 %v440, 2147483648
        %v468 = vsel %vm466, %v467, %v465
        %v469 = vadd.f32 %v429, %v433
        %v470 = vadd.f32 %v430, %v434
        %v471 = vadd.f32 %v431, %v435
        %v472 = vadd.f32 %v432, %v436
        %v473 = vmul.f32 %v447, 2.0
        %v474 = vmul.f32 %v454, 2.0
        %v475 = vmul.f32 %v461, 2.0
        %v476 = vmul.f32 %v468, 2.0
        %v477 = vsub.f32 %v469, %v473
        %v478 = vsub.f32 %v470, %v474
        %v479 = vsub.f32 %v471, %v475
        %v480 = vsub.f32 %v472, %v476
        %v481 = vadd.f32 %v477, %v478
        %v482 = vadd.f32 %v481, %v479
        %v483 = vadd.f32 %v482, %v480
        %484 = vadd.xlane.f32.xlu0 %v483
        %v485 = vpop.xlane.xlu0 %484
        %v486 = vrot.slane %v485, 4
        %v487 = vadd.f32 %v485, %v486
        %v488 = vrot.slane %v487, 2
        %v489 = vadd.f32 %v487, %v488
        %v490 = vrot.slane %v489, 1
        %v491 = vadd.f32 %v489, %v490
        %s492 = vtos %v491
        %v493 = vadd.f32 %v433, %v434
        %v494 = vadd.f32 %v493, %v435
        %v495 = vadd.f32 %v494, %v436
        %496 = vadd.xlane.f32.xlu0 %v495
        %v497 = vpop.xlane.xlu0 %496
        %v498 = vrot.slane %v497, 4
        %v499 = vadd.f32 %v497, %v498
        %v500 = vrot.slane %v499, 2
        %v501 = vadd.f32 %v499, %v500
        %v502 = vrot.slane %v501, 1
        %v503 = vadd.f32 %v501, %v502
        %s504 = vtos %v503
        %v505 = vlog2.pop %v433
        %v506 = vmul.f32 %v505, 0.6931472
        %v507 = vlog2.pop %v434
        %v508 = vmul.f32 %v507, 0.6931472
        %v509 = vlog2.pop %v435
        %v510 = vmul.f32 %v509, 0.6931472
        %v511 = vlog2.pop %v436
        %v512 = vmul.f32 %v511, 0.6931472
        %v513 = vlog2.pop %v429
        %v514 = vmul.f32 %v513, 0.6931472
        %v515 = vlog2.pop %v430
        %v516 = vmul.f32 %v515, 0.6931472
        %v517 = vlog2.pop %v431
        %v518 = vmul.f32 %v517, 0.6931472
        %v519 = vlog2.pop %v432
        %v520 = vmul.f32 %v519, 0.6931472
        %v521 = vsub.f32 %v506, %v514
        %v522 = vsub.f32 %v508, %v516
        %v523 = vsub.f32 %v510, %v518
        %v524 = vsub.f32 %v512, %v520
        %v525 = vand.u32 2147483647, %v521
        %v526 = vand.u32 2147483647, %v522
        %v527 = vand.u32 2147483647, %v523
        %v528 = vand.u32 2147483647, %v524
        %v529 = vadd.f32 %v525, %v526
        %v530 = vadd.f32 %v529, %v527
        %v531 = vadd.f32 %v530, %v528
        %532 = vadd.xlane.f32.xlu0 %v531
        %v533 = vpop.xlane.xlu0 %532
        %v534 = vrot.slane %v533, 4
        %v535 = vadd.f32 %v533, %v534
        %v536 = vrot.slane %v535, 2
        %v537 = vadd.f32 %v535, %v536
        %v538 = vrot.slane %v537, 1
        %v539 = vadd.f32 %v537, %v538
        %s540 = vtos %v539
        %s541 = smul.f32 %s540, 0.5
        %v542 = vlaneseq
        %v543 = vshrl.u32 %v542, 7
        %v544 = vlaneseq
        %v545 = vand.u32 %v544, 127
        %vm546 = vcmp.eq.s32.totalorder %v543, 0
        %vm547 = vcmp.eq.s32.totalorder %v545, 0
        %vm548 = vmand %vm546, %vm547
        %v549 = vstv %s492
        %v550 = vsel %vm548, %v549, 0.0
        %vm551 = vcmp.eq.s32.totalorder %v545, 1
        %vm552 = vmand %vm546, %vm551
        %v553 = vstv %s504
        %v554 = vsel %vm552, %v553, 0.0
        %v555 = vadd.f32 %v550, %v554
        %vm556 = vcmp.eq.s32.totalorder %v545, 2
        %vm557 = vmand %vm546, %vm556
        %v558 = vstv %s541
        %v559 = vsel %vm557, %v558, 0.0
        %v560 = vadd.f32 %v555, %v559
        %561 = vst [vmem:[%s201] sm:$0xff] %v560
        %s562 = sand.u32 %s75, 1
        %s563 = scalar_lea.sflag [#allocation4], %s562
        %s564 = sand.u32 %s75, 1
        %s565 = smul.addr %s564, 8
        %s566 = scalar_lea.vmem [#allocation7], %s565
        // Predicated region
        $region37: #{tpu_custom_call.1} parent=27 // pred_check
          %p567 = pneg %p85
        $region38: #{tpu_custom_call.1} parent=27 // pred_check_branch
          %569 = sbr.rel (%p567) target = $region40
        $region39: #{tpu_custom_call.1} parent=27 // pred_region
          %s571 = ssub.s32 128, 128
          %572 = vsyncadd %s563, %s571
          %s573 = smul.addr %s20, 128
          %s574 = scalar_lea.hbm %s2, %s573
          %s576 = sshll.u32 %s566, 4
          %s577 = int_to_ptr.vmem [resolvable:$true] %s576
          %579 = dma.vmem_to_hbm [thread:$0]  %s577, 128, %s574, %s563
        $region40: #{tpu_custom_call.1} parent=27 // pred_fallthru
          _
      $region28: #{tpu_custom_call.1} parent=5 // pred_fallthru
        _
      %p580 = scmp.le.s32.totalorder 2, %s15
      // Predicated region
      $region41: #{tpu_custom_call.1} parent=5 // pred_check
        %p581 = pneg %p580
      $region42: #{tpu_custom_call.1} parent=5 // pred_check_branch
        %583 = sbr.rel (%p581) target = $region44
      $region43: #{tpu_custom_call.1} parent=5 // pred_region
        %s584 = ssub.s32 %s15, 2
        // Predicated region
        $region45: #{tpu_custom_call.1} parent=43 // pred_check
          %p585 = pneg %p91
        $region46: #{tpu_custom_call.1} parent=43 // pred_check_branch
          %587 = sbr.rel (%p585) target = $region48
        $region47: #{tpu_custom_call.1} parent=43 // pred_region
          %s588 = sand.u32 %s76, 1
          %s589 = scalar_lea.sflag [#allocation4], %s588
          %s590 = sand.u32 %s76, 1
          %s591 = smul.addr %s590, 8
          %s592 = scalar_lea.vmem [#allocation7], %s591
          %593 = dma.done %s589, 128
        $region48: #{tpu_custom_call.1} parent=43 // pred_fallthru
          _
      $region44: #{tpu_custom_call.1} parent=5 // pred_fallthru
        _
    $region6: #{tpu_custom_call.1} parent=1 // loop_footer
      %s19 = sadd.s32 1, %s15
    $region7: #{tpu_custom_call.1} parent=1 // loop_footer_branch
      %14 = sbr.rel target = $region3
    $region8: #{tpu_custom_call.1} parent=1 // loop_exit
      _
    %594 = vsyncpa [#allocation3], 1
    %s595 = scalar_lea.sflag [#allocation3], 1
    %596 = vsyncpa %s595, 1
    %597 = vsyncpa [#allocation6], 1
    %598 = vsyncpa [#allocation4], 1
    %s599 = scalar_lea.sflag [#allocation4], 1
    %600 = vsyncpa %s599, 1

</llo_original>
